<compile_context>
chip_gen: v5e
topology: v5e:2x2
jax: 0.10.0
libtpu: 0.0.40
codegen_flags: <defaults>
</compile_context>

<pallas_src>
import math

import jax
import jax.numpy as jnp
import numpy as np
from jax.experimental import pallas as pl
from jax.experimental.pallas import tpu as pltpu


# ---------------------------------------------------------------------------
# kernels
# ---------------------------------------------------------------------------
def _pool_kernel(z_ref, a_ref, out_ref):
    # z_ref:  (TR, HW)    rows of z in native NCHW order ((n, c) flattened)
    # a_ref:  (HW, P_pad) averaging matrix (1/count per part, zeros elsewhere)
    # out_ref:(TR, P_pad) pooled features (transposed layout: row = (n, c))
    z = z_ref[...].astype(jnp.float32)
    out_ref[...] = jnp.dot(z, a_ref[...], preferred_element_type=jnp.float32)


def _fc_kernel(p_ref, w_ref, b_ref, out_ref):
    # p_ref:  (TR2, C)      pooled features, row = (n, p)
    # w_ref:  (C, D + K)    fused weight  [W1^T | W1^T W2^T]
    # b_ref:  (1, D + K)    fused bias    [b1   | b1 W2^T + b2]
    # out_ref:(TR2, D + K)  [z_feat | y_pred] written as one lane-dense slab
    out_ref[...] = (
        jnp.dot(p_ref[...], w_ref[...], preferred_element_type=jnp.float32)
        + b_ref[...])


# ---------------------------------------------------------------------------
# wrapper
# ---------------------------------------------------------------------------
_VMEM_LIMIT_BYTES = 32 * 1024 * 1024  # safe on v5e/v6e (128 MiB) and v7x (64 MiB)
_TARGET_TILE_BYTES = 4 * 1024 * 1024  # ~4 MiB per input tile, x2 double-buffer


def _round_up(x, m):
    return ((x + m - 1) // m) * m


def _pick_row_tile(total_rows, row_bytes, target_bytes=_TARGET_TILE_BYTES):
    """Largest multiple-of-8 row tile whose bytes stay near target_bytes."""
    by_budget = (target_bytes // max(row_bytes, 1)) // 8 * 8
    rows = max(8, min(_round_up(total_rows, 8), by_budget if by_budget else 8))
    return int(rows)


def pnnm_head_forward(z_nchw, w1, b1, w2, b2, h):
    """z_nchw: (N, C, H, W).  w1: (out_dim, in_dim), b1: (out_dim,),
    w2: (num_classes, out_dim), b2: (num_classes,) — PyTorch Linear layout."""
    N, C, H, W = z_nchw.shape
    D = w1.shape[0]            # out_dim
    K = w2.shape[0]            # num_classes

    part_h = math.ceil(H / h)  # torch.split chunk size along H
    P = math.ceil(H / part_h)  # number of parts actually produced
    HW = H * W
    P_pad = _round_up(P, 8)    # pad pooled lane dim to a clean sublane multiple

    # Averaging matrix A^T (HW, P_pad): column p holds 1/count_p on the pixels
    # of part p, zero elsewhere (the ragged last part is handled exactly).
    row_part = np.arange(H) // part_h                          # (H,)
    onehot = (row_part[None, :] == np.arange(P)[:, None])      # (P, H)
    counts = onehot.sum(axis=1).astype(np.float32) * W         # (P,)
    a_rows = onehot.astype(np.float32) / counts[:, None]       # (P, H)
    a_full = np.repeat(a_rows, W, axis=1)                      # (P, HW)
    a_t_np = np.zeros((HW, P_pad), np.float32)
    a_t_np[:, :P] = a_full.T
    a_t = jnp.asarray(a_t_np)

    # --------------- kernel 1: mean pool in native NCHW layout --------------
    z2d = z_nchw.reshape(N * C, HW)         # free reshape: no transpose, no pad
    NC = N * C
    row_bytes = HW * z2d.dtype.itemsize
    TR = min(_pick_row_tile(NC, row_bytes), _round_up(NC, 8))
    grid1 = (pl.cdiv(NC, TR),)

    pooled_t = pl.pallas_call(
        _pool_kernel,
        out_shape=jax.ShapeDtypeStruct((NC, P_pad), jnp.float32),
        grid=grid1,
        in_specs=[
            pl.BlockSpec((TR, HW), lambda i: (i, 0)),       # streamed z tile
            pl.BlockSpec((HW, P_pad), lambda i: (0, 0)),    # resident A^T
        ],
        out_specs=pl.BlockSpec((TR, P_pad), lambda i: (i, 0)),
        compiler_params=pltpu.CompilerParams(
            dimension_semantics=("parallel",),
            vmem_limit_bytes=_VMEM_LIMIT_BYTES),
        cost_estimate=pl.CostEstimate(
            flops=2 * NC * HW * P_pad,
            transcendentals=0,
            bytes_accessed=NC * HW * int(z2d.dtype.itemsize)
            + HW * P_pad * 4 + NC * P_pad * 4),
    )(z2d, a_t)

    # Tiny (N*C, P) -> (N*P, C) reshuffle; negligible vs. the z read above.
    pooled = (pooled_t[:, :P]
              .reshape(N, C, P)
              .transpose(0, 2, 1)
              .reshape(N * P, C))

    # --------------- kernel 2: fused fc1 / fc2 (one MXU pass) ---------------
    hp = jax.lax.Precision.HIGHEST
    w1_t = jnp.transpose(w1).astype(jnp.float32)                      # (C, D)
    w2_t = jnp.transpose(w2).astype(jnp.float32)                      # (D, K)
    w_comb = jnp.concatenate(
        [w1_t, jnp.dot(w1_t, w2_t, precision=hp)], axis=1)            # (C, D+K)
    b_comb = jnp.concatenate(
        [b1.astype(jnp.float32),
         jnp.dot(b1.astype(jnp.float32), w2_t, precision=hp)
         + b2.astype(jnp.float32)]).reshape(1, D + K)

    R2 = N * P
    DK = D + K
    TR2 = min(_pick_row_tile(R2, C * 4), _round_up(R2, 8))
    grid2 = (pl.cdiv(R2, TR2),)

    out = pl.pallas_call(
        _fc_kernel,
        out_shape=jax.ShapeDtypeStruct((R2, DK), jnp.float32),
        grid=grid2,
        in_specs=[
            pl.BlockSpec((TR2, C), lambda i: (i, 0)),       # pooled rows
            pl.BlockSpec((C, DK), lambda i: (0, 0)),        # resident weight
            pl.BlockSpec((1, DK), lambda i: (0, 0)),        # resident bias
        ],
        out_specs=pl.BlockSpec((TR2, DK), lambda i: (i, 0)),
        compiler_params=pltpu.CompilerParams(
            dimension_semantics=("parallel",),
            vmem_limit_bytes=_VMEM_LIMIT_BYTES),
        cost_estimate=pl.CostEstimate(
            flops=2 * R2 * C * DK,
            transcendentals=0,
            bytes_accessed=R2 * C * 4 + C * DK * 4 + DK * 4 + R2 * DK * 4),
    )(pooled, w_comb, b_comb)

    z_feat = out[:, :D].reshape(N, P, D)
    y_pred = out[:, D:].reshape(N, P, K)
    return z_feat, y_pred


# ---------------------------------------------------------------------------
# self-test
# ---------------------------------------------------------------------------
if __name__ == "__main__":
    # small shapes consistent with the module
    N, C, H, W = 2, 16, 16, 16          # in_dim = C = 16
    h = 4                               # -> 4 parts of height 4
    out_dim, num_classes = 32, 8

    key = jax.random.PRNGKey(0)
    kz, kw1, kb1, kw2, kb2 = jax.random.split(key, 5)
    z = jax.random.normal(kz, (N, C, H, W), dtype=jnp.float32)

    # deterministic "Linear" parameters (PyTorch layout: weight (out, in))
    bound1 = 1.0 / math.sqrt(C)
    w1 = jax.random.uniform(kw1, (out_dim, C), minval=-bound1, maxval=bound1,
                            dtype=jnp.float32)
    b1 = jax.random.uniform(kb1, (out_dim,), minval=-bound1, maxval=bound1,
                            dtype=jnp.float32)
    bound2 = 1.0 / math.sqrt(out_dim)
    w2 = jax.random.uniform(kw2, (num_classes, out_dim), minval=-bound2,
                            maxval=bound2, dtype=jnp.float32)
    b2 = jax.random.uniform(kb2, (num_classes,), minval=-bound2, maxval=bound2,
                            dtype=jnp.float32)

    z_feat, y_pred = pnnm_head_forward(z, w1, b1, w2, b2, h)
    jax.block_until_ready((z_feat, y_pred))

    # pure-JAX reference mirroring the PyTorch forward
    part_h = math.ceil(H / h)
    P = math.ceil(H / part_h)
    parts = [z[:, :, p * part_h:(p + 1) * part_h, :] for p in range(P)]
    pooled_ref = jnp.stack([jnp.mean(p, axis=(2, 3)) for p in parts], axis=1)
    z_ref = pooled_ref @ w1.T + b1
    y_ref = z_ref @ w2.T + b2

    assert jnp.allclose(z_feat, z_ref, rtol=1e-3, atol=1e-3), "fc1 mismatch"
    assert jnp.allclose(y_pred, y_ref, rtol=1e-3, atol=1e-3), "fc2 mismatch"

    print("KERNEL_OK")
</pallas_src>

<mosaic_0001>
module attributes {stable_mosaic.version = 11 : i64} {
  func.func @_pool_kernel(%arg0: i32, %arg1: memref<32x256xf32, #tpu.memory_space<vmem>>, %arg2: memref<256x8xf32, #tpu.memory_space<vmem>>, %arg3: memref<32x8xf32, #tpu.memory_space<vmem>>) attributes {dimension_semantics = [#tpu.dimension_semantics<parallel>], iteration_bounds = array<i64: 1>, scalar_prefetch = 0 : i64, scratch_operands = 0 : i64, tpu.core_type = #tpu.core_type<tc>, window_params = [{transform_indices = @transform_0, window_bounds = array<i64: 32, 256>}, {pipeline_mode = #tpu.pipeline_mode<synchronous>, transform_indices = @transform_1, window_bounds = array<i64: 256, 8>}, {transform_indices = @transform_2, window_bounds = array<i64: 32, 8>}]} {
    %c0 = arith.constant 0 : index
    %c0_0 = arith.constant 0 : index
    %0 = vector.load %arg1[%c0, %c0_0] : memref<32x256xf32, #tpu.memory_space<vmem>>, vector<32x256xf32>
    %c0_1 = arith.constant 0 : index
    %c0_2 = arith.constant 0 : index
    %1 = vector.load %arg2[%c0_1, %c0_2] : memref<256x8xf32, #tpu.memory_space<vmem>>, vector<256x8xf32>
    %cst = arith.constant dense<0.000000e+00> : vector<32x8xf32>
    %2 = tpu.matmul %0, %1, %cst {dimension_numbers = #tpu.dot_dimension_numbers<[1], [0], [0], [1], [0, 0, 1, 1], [], []>} : vector<32x256xf32>, vector<256x8xf32>, vector<32x8xf32> -> vector<32x8xf32>
    %c0_3 = arith.constant 0 : index
    %c0_4 = arith.constant 0 : index
    %3 = vector.load %arg3[%c0_3, %c0_4] : memref<32x8xf32, #tpu.memory_space<vmem>>, vector<32x8xf32>
    tpu.vector_store %arg3[%c0_3, %c0_4], %2 {strides = array<i32>} : memref<32x8xf32, #tpu.memory_space<vmem>>, vector<32x8xf32>,
    return
  }
  func.func @transform_0(%arg0: i32) -> (i32, i32) {
    %c0_i32 = arith.constant 0 : i32
    %c0_i32_0 = arith.constant 0 : i32
    return %arg0, %c0_i32 : i32, i32
  }
  func.func @transform_1(%arg0: i32) -> (i32, i32) {
    %c0_i32 = arith.constant 0 : i32
    %c0_i32_0 = arith.constant 0 : i32
    %c0_i32_1 = arith.constant 0 : i32
    return %c0_i32, %c0_i32_0 : i32, i32
  }
  func.func @transform_2(%arg0: i32) -> (i32, i32) {
    %c0_i32 = arith.constant 0 : i32
    %c0_i32_0 = arith.constant 0 : i32
    return %arg0, %c0_i32 : i32, i32
  }
}

</mosaic_0001>

<llo_original>
// kernel: tpu_custom_call.1
$region0: #{tpu_custom_call.1}
  #allocation0 [shape = 'u32[]', space=smem, size = 0x4, offset = 0x4, fixed_abs, tag = 'smem constant byte address 0x4 - core index']
  #allocation1 [shape = 'u32[72,128]{1,0:T(1,128)}', space=vmem, size = 0x9000, scoped, tag = 'internal scratch']
  %s0 = inlined_call_operand.vmem [shape: f32[32,256], index: 0, kind: input, shape index: {}]
  %s1 = inlined_call_operand.vmem [shape: f32[256,8], index: 1, kind: input, shape index: {}]
  %s2 = inlined_call_operand.vmem [shape: f32[32,8], index: 2, kind: output, shape index: {}]
  %s3 = sld [smem:[#allocation0]]
  $region18: #{tpu_custom_call.1} parent=0
    _
  %s5 = ssub.s32 1, %s3
  %s6 = scalar_select 0, %s5, %s3
  // Predicated region
  $region2: #{tpu_custom_call.1} parent=0 // pred_check
    _
  $region3: #{tpu_custom_call.1} parent=0 // pred_check_branch
    %8 = sbr.rel (0) target = $region5
  $region4: #{tpu_custom_call.1} parent=0 // pred_region
    _
  $region5: #{tpu_custom_call.1} parent=0 // pred_fallthru
    _
  // Predicated region
  $region6: #{tpu_custom_call.1} parent=0 // pred_check
    _
  $region7: #{tpu_custom_call.1} parent=0 // pred_check_branch
    %10 = sbr.rel (0) target = $region9
  $region8: #{tpu_custom_call.1} parent=0 // pred_region
    _
  $region9: #{tpu_custom_call.1} parent=0 // pred_fallthru
    _
  %v11 = vld [vmem:[%s0] sm:$0xff]
  %v12 = vld [vmem:[%s0 + $0x8] sm:$0xff]
  %v13 = vld [vmem:[%s0 + $0x10] sm:$0xff]
  %v14 = vld [vmem:[%s0 + $0x18] sm:$0xff]
  %v15 = vld [vmem:[%s0 + $0x20] sm:$0xff]
  %v16 = vld [vmem:[%s0 + $0x28] sm:$0xff]
  %v17 = vld [vmem:[%s0 + $0x30] sm:$0xff]
  %v18 = vld [vmem:[%s0 + $0x38] sm:$0xff]
  %v19 = vld [vmem:[%s1] sm:$0xff]
  %v20 = vld [vmem:[%s1 + $0x8] sm:$0xff]
  %v21 = vld [vmem:[%s1 + $0x10] sm:$0xff]
  %v22 = vld [vmem:[%s1 + $0x18] sm:$0xff]
  %v23 = vld [vmem:[%s1 + $0x20] sm:$0xff]
  %v24 = vld [vmem:[%s1 + $0x28] sm:$0xff]
  %v25 = vld [vmem:[%s1 + $0x30] sm:$0xff]
  %v26 = vld [vmem:[%s1 + $0x38] sm:$0xff]
  %v27 = vld [vmem:[%s1 + $0x40] sm:$0xff]
  %v28 = vld [vmem:[%s1 + $0x48] sm:$0xff]
  %v29 = vld [vmem:[%s1 + $0x50] sm:$0xff]
  %v30 = vld [vmem:[%s1 + $0x58] sm:$0xff]
  %v31 = vld [vmem:[%s1 + $0x60] sm:$0xff]
  %v32 = vld [vmem:[%s1 + $0x68] sm:$0xff]
  %v33 = vld [vmem:[%s1 + $0x70] sm:$0xff]
  %v34 = vld [vmem:[%s1 + $0x78] sm:$0xff]
  %v35 = vld [vmem:[%s1 + $0x80] sm:$0xff]
  %v36 = vld [vmem:[%s1 + $0x88] sm:$0xff]
  %v37 = vld [vmem:[%s1 + $0x90] sm:$0xff]
  %v38 = vld [vmem:[%s1 + $0x98] sm:$0xff]
  %v39 = vld [vmem:[%s1 + $0xa0] sm:$0xff]
  %v40 = vld [vmem:[%s1 + $0xa8] sm:$0xff]
  %v41 = vld [vmem:[%s1 + $0xb0] sm:$0xff]
  %v42 = vld [vmem:[%s1 + $0xb8] sm:$0xff]
  %v43 = vld [vmem:[%s1 + $0xc0] sm:$0xff]
  %v44 = vld [vmem:[%s1 + $0xc8] sm:$0xff]
  %v45 = vld [vmem:[%s1 + $0xd0] sm:$0xff]
  %v46 = vld [vmem:[%s1 + $0xd8] sm:$0xff]
  %v47 = vld [vmem:[%s1 + $0xe0] sm:$0xff]
  %v48 = vld [vmem:[%s1 + $0xe8] sm:$0xff]
  %v49 = vld [vmem:[%s1 + $0xf0] sm:$0xff]
  %v50 = vld [vmem:[%s1 + $0xf8] sm:$0xff]
  %51 = vmatpush.msra.mxu0 %v34
  %52 = vmatpush.msra.mxu0 %v33
  %53 = vmatpush.msra.mxu0 %v32
  %54 = vmatpush.msra.mxu0 %v31
  %55 = vmatpush.msra.mxu0 %v30
  %56 = vmatpush.msra.mxu0 %v29
  %57 = vmatpush.msra.mxu0 %v28
  %58 = vmatpush.msra.mxu0 %v27
  %59 = vmatpush.msra.mxu0 %v26
  %60 = vmatpush.msra.mxu0 %v25
  %61 = vmatpush.msra.mxu0 %v24
  %62 = vmatpush.msra.mxu0 %v23
  %63 = vmatpush.msra.mxu0 %v22
  %64 = vmatpush.msra.mxu0 %v21
  %65 = vmatpush.msra.mxu0 %v20
  %66 = vmatpush.msra.mxu0 %v19
  %67 = vmatmul.f32.gmra.mxu0 %v11
  %v68 = vpop.f32.mrf.mxu0
  %v69 = vadd.f32 0.0, %v68
  %70 = vmatmul.f32.gmra.mxu0 %v13
  %v71 = vpop.f32.mrf.mxu0
  %v72 = vadd.f32 0.0, %v71
  %73 = vmatmul.f32.gmra.mxu0 %v15
  %v74 = vpop.f32.mrf.mxu0
  %v75 = vadd.f32 0.0, %v74
  %76 = vmatmul.f32.gmra.mxu0 %v17
  %v77 = vpop.f32.mrf.mxu0
  %v78 = vadd.f32 0.0, %v77
  %79 = vdwg.mxu0
  %80 = vmatpush.msra.mxu0 %v50
  %81 = vmatpush.msra.mxu0 %v49
  %82 = vmatpush.msra.mxu0 %v48
  %83 = vmatpush.msra.mxu0 %v47
  %84 = vmatpush.msra.mxu0 %v46
  %85 = vmatpush.msra.mxu0 %v45
  %86 = vmatpush.msra.mxu0 %v44
  %87 = vmatpush.msra.mxu0 %v43
  %88 = vmatpush.msra.mxu0 %v42
  %89 = vmatpush.msra.mxu0 %v41
  %90 = vmatpush.msra.mxu0 %v40
  %91 = vmatpush.msra.mxu0 %v39
  %92 = vmatpush.msra.mxu0 %v38
  %93 = vmatpush.msra.mxu0 %v37
  %94 = vmatpush.msra.mxu0 %v36
  %95 = vmatpush.msra.mxu0 %v35
  %96 = vmatmul.f32.gmra.mxu0 %v12
  %v97 = vpop.f32.mrf.mxu0
  %v98 = vadd.f32 %v69, %v97
  %99 = vmatmul.f32.gmra.mxu0 %v14
  %v100 = vpop.f32.mrf.mxu0
  %v101 = vadd.f32 %v72, %v100
  %102 = vmatmul.f32.gmra.mxu0 %v16
  %v103 = vpop.f32.mrf.mxu0
  %v104 = vadd.f32 %v75, %v103
  %105 = vmatmul.f32.gmra.mxu0 %v18
  %v106 = vpop.f32.mrf.mxu0
  %v107 = vadd.f32 %v78, %v106
  %108 = vdwg.mxu0
  %vm109 = vcmask 64512
  %110 = vst.msk [vmem:[%s2] sm:$0xff] %vm109, %v98
  %111 = vst.msk [vmem:[%s2 + $0x8] sm:$0xff] %vm109, %v101
  %112 = vst.msk [vmem:[%s2 + $0x10] sm:$0xff] %vm109, %v104
  %113 = vst.msk [vmem:[%s2 + $0x18] sm:$0xff] %vm109, %v107
  // Predicated region
  $region10: #{tpu_custom_call.1} parent=0 // pred_check
    _
  $region11: #{tpu_custom_call.1} parent=0 // pred_check_branch
    %115 = sbr.rel (0) target = $region13
  $region12: #{tpu_custom_call.1} parent=0 // pred_region
    _
  $region13: #{tpu_custom_call.1} parent=0 // pred_fallthru
    _
  // Predicated region
  $region14: #{tpu_custom_call.1} parent=0 // pred_check
    _
  $region15: #{tpu_custom_call.1} parent=0 // pred_check_branch
    %117 = sbr.rel (0) target = $region17
  $region16: #{tpu_custom_call.1} parent=0 // pred_region
    _
  $region17: #{tpu_custom_call.1} parent=0 // pred_fallthru
    _

</llo_original>
